<compile_context>
chip_gen: v7x
topology: tpu7x:2x2x1
jax: 0.10.0
libtpu: 0.0.40
codegen_flags: <defaults>
</compile_context>

<pallas_src>
import jax
import jax.numpy as jnp
from jax.experimental import pallas as pl
from jax.experimental.pallas import tpu as pltpu

_MIB = 1024 * 1024


def _round_up(x: int, m: int) -> int:
    return ((x + m - 1) // m) * m


def _sublane(dtype) -> int:
    # Minimum second-minor tile: 8 for 4-byte, 16 for 2-byte, 32 for 1-byte.
    return max(8, 32 // jnp.dtype(dtype).itemsize)


# ---------------------------------------------------------------------------
# Kernels
# ---------------------------------------------------------------------------
def _linear_kernel_acc(x_ref, w_ref, b_ref, o_ref, acc_ref):
    """General path: f32 VMEM accumulator, cast to o_ref.dtype in epilogue."""
    k = pl.program_id(2)

    @pl.when(k == 0)
    def _():
        acc_ref[...] = jnp.zeros_like(acc_ref)

    acc_ref[...] += jnp.dot(
        x_ref[...], w_ref[...], preferred_element_type=jnp.float32
    )

    @pl.when(k == pl.num_programs(2) - 1)
    def _():
        o_ref[...] = (acc_ref[...] + b_ref[...]).astype(o_ref.dtype)


def _linear_kernel_f32out(x_ref, w_ref, b_ref, o_ref):
    """f32-output path: accumulate directly into the VMEM-resident output tile
    (its block index is constant across k) -> no scratch, no epilogue copy."""
    k = pl.program_id(2)

    @pl.when(k == 0)
    def _():
        o_ref[...] = jnp.zeros_like(o_ref)

    o_ref[...] += jnp.dot(
        x_ref[...], w_ref[...], preferred_element_type=jnp.float32
    )

    @pl.when(k == pl.num_programs(2) - 1)
    def _():
        o_ref[...] += b_ref[...]


# ---------------------------------------------------------------------------
# Tiling / pallas_call plumbing
# ---------------------------------------------------------------------------
def _select_tiles(M, N, K, compute_dtype, tm, tn, tk):
    """Effective tile sizes respecting (sublane, 128) layout constraints."""
    sub = _sublane(compute_dtype)
    if tm is None or tn is None or tk is None:
        tm_d, tn_d, tk_d = 512, 1024, 512
        if M <= 256:
            # GEMV-like small batch: purely weight-HBM-bound -> wide N, deep K
            # tiles so the grid is dominated by large weight DMAs.
            n128 = _round_up(N, 128)
            tn_d = 2048 if n128 >= 2 * 2048 else min(2048, n128)
            tk_d = 1024
        tm = tm_d if tm is None else tm
        tn = tn_d if tn is None else tn
        tk = tk_d if tk is None else tk
    tm_e = _round_up(min(tm, _round_up(M, sub)), sub)
    tn_e = _round_up(min(tn, _round_up(N, 128)), 128)
    tk_e = _round_up(min(tk, _round_up(K, 128)), 128)
    return tm_e, tn_e, tk_e


def _linear_call(x_p, w_p, b_p, tm_e, tn_e, tk_e, out_dtype):
    M_p, K_p = x_p.shape
    _, N_p = w_p.shape
    grid = (M_p // tm_e, N_p // tn_e, K_p // tk_e)
    n_tiles_m, n_tiles_n = grid[0], grid[1]

    compute_itemsize = jnp.dtype(x_p.dtype).itemsize
    out_itemsize = jnp.dtype(out_dtype).itemsize
    f32_out = jnp.dtype(out_dtype) == jnp.dtype(jnp.float32)

    # Advisory cost estimate incl. HBM re-streaming of x (per N tile) and
    # W (per M tile).
    cost = pl.CostEstimate(
        flops=2 * M_p * N_p * K_p,
        transcendentals=0,
        bytes_accessed=(
            M_p * K_p * compute_itemsize * n_tiles_n
            + K_p * N_p * compute_itemsize * n_tiles_m
            + N_p * 4 * n_tiles_m
            + M_p * N_p * out_itemsize
        ),
    )

    # Actual VMEM working set (double-buffered inputs/outputs + scratch),
    # with headroom; clamp to 48 MiB so it is safe on v7x (64 MiB physical)
    # while still lifting the v5e 16 MiB / default 32 MiB scoped limits.
    vmem_needed = (
        2 * (tm_e * tk_e + tk_e * tn_e) * compute_itemsize
        + 2 * tn_e * 4
        + 2 * tm_e * tn_e * out_itemsize
        + (0 if f32_out else tm_e * tn_e * 4)
    )
    vmem_limit = int(min(max(vmem_needed + 8 * _MIB, 32 * _MIB), 48 * _MIB))

    kernel = _linear_kernel_f32out if f32_out else _linear_kernel_acc
    scratch = [] if f32_out else [pltpu.VMEM((tm_e, tn_e), jnp.float32)]

    return pl.pallas_call(
        kernel,
        out_shape=jax.ShapeDtypeStruct((M_p, N_p), out_dtype),
        grid_spec=pltpu.PrefetchScalarGridSpec(
            num_scalar_prefetch=0,
            grid=grid,
            in_specs=[
                pl.BlockSpec((tm_e, tk_e), lambda i, j, k: (i, k)),   # x tile
                pl.BlockSpec((tk_e, tn_e), lambda i, j, k: (k, j)),   # W.T tile
                pl.BlockSpec((1, tn_e), lambda i, j, k: (0, j)),      # bias tile
            ],
            out_specs=pl.BlockSpec((tm_e, tn_e), lambda i, j, k: (i, j)),
            scratch_shapes=scratch,
        ),
        compiler_params=pltpu.CompilerParams(
            dimension_semantics=("parallel", "parallel", "arbitrary"),
            vmem_limit_bytes=vmem_limit,
        ),
        cost_estimate=cost,
    )(x_p, w_p, b_p)


# ---------------------------------------------------------------------------
# Functional wrapper (one-off calls)
# ---------------------------------------------------------------------------
def linear_forward(x, weight, bias=None, *, compute_dtype=None,
                   tm=None, tn=None, tk=None):
    """Pallas equivalent of Linear.forward (inference): y = x @ W.T + b.

    x:      (batch, in_dim)
    weight: (out_dim, in_dim)
    bias:   (out_dim,) or None
    returns (batch, out_dim), dtype of x.
    """
    M, K = x.shape
    N, K2 = weight.shape
    assert K == K2, "in_dim mismatch"
    out_dtype = x.dtype
    if compute_dtype is None:
        # Explicit choice: never silently downcast f32 weights to bf16.
        compute_dtype = jnp.promote_types(x.dtype, weight.dtype)
    compute_dtype = jnp.dtype(compute_dtype)

    tm_e, tn_e, tk_e = _select_tiles(M, N, K, compute_dtype, tm, tn, tk)
    M_p, N_p, K_p = _round_up(M, tm_e), _round_up(N, tn_e), _round_up(K, tk_e)

    x_c = x.astype(compute_dtype)
    if (M_p, K_p) != (M, K):
        x_c = jnp.pad(x_c, ((0, M_p - M), (0, K_p - K)))

    # NOTE: for repeated calls with the same weight use `PallasLinear`, which
    # caches this transpose + pad at construction (no per-call HBM pass).
    w_t = weight.astype(compute_dtype).T                  # (K, N), lane-dense N
    if (K_p, N_p) != (K, N):
        w_t = jnp.pad(w_t, ((0, K_p - K), (0, N_p - N)))

    if bias is None:
        b_p = jnp.zeros((1, N_p), jnp.float32)
    else:
        b = bias.astype(jnp.float32)
        if N_p != N:
            b = jnp.pad(b, (0, N_p - N))
        b_p = b.reshape(1, N_p)

    out_p = _linear_call(x_c, w_t, b_p, tm_e, tn_e, tk_e, out_dtype)
    if (M_p, N_p) != (M, N):
        return out_p[:M, :N]
    return out_p


# ---------------------------------------------------------------------------
# Module-style wrapper with cached (transposed + padded) weight
# ---------------------------------------------------------------------------
class PallasLinear:
    """Inference-only equivalent of the PyTorch Linear module.

    The transposed weight (K, N) and the bias are padded to tile multiples
    once at construction, so per-call XLA transpose/pad HBM passes vanish.
    """

    def __init__(self, weight, bias=None, *, compute_dtype=None,
                 tm=None, tn=1024, tk=512):
        weight = jnp.asarray(weight)
        self.out_dim, self.in_dim = weight.shape
        self.compute_dtype = (jnp.dtype(compute_dtype)
                              if compute_dtype is not None else weight.dtype)
        self.tm = tm  # resolved per-call from batch size
        self.tn_e = _round_up(min(tn, _round_up(self.out_dim, 128)), 128)
        self.tk_e = _round_up(min(tk, _round_up(self.in_dim, 128)), 128)
        self.N_p = _round_up(self.out_dim, self.tn_e)
        self.K_p = _round_up(self.in_dim, self.tk_e)

        w_t = weight.astype(self.compute_dtype).T          # (K, N)
        if (self.K_p, self.N_p) != (self.in_dim, self.out_dim):
            w_t = jnp.pad(w_t, ((0, self.K_p - self.in_dim),
                                (0, self.N_p - self.out_dim)))
        self.w_p = w_t

        if bias is None:
            b = jnp.zeros((self.N_p,), jnp.float32)
        else:
            b = jnp.asarray(bias).astype(jnp.float32)
            if self.N_p != self.out_dim:
                b = jnp.pad(b, (0, self.N_p - self.out_dim))
        self.b_p = b.reshape(1, self.N_p)

    def __call__(self, x):
        M, K = x.shape
        assert K == self.in_dim, "in_dim mismatch"
        out_dtype = x.dtype
        sub = _sublane(self.compute_dtype)
        tm = 512 if self.tm is None else self.tm
        tm_e = _round_up(min(tm, _round_up(M, sub)), sub)
        M_p = _round_up(M, tm_e)

        x_c = x.astype(self.compute_dtype)
        if (M_p, self.K_p) != (M, K):
            x_c = jnp.pad(x_c, ((0, M_p - M), (0, self.K_p - K)))

        out_p = _linear_call(x_c, self.w_p, self.b_p,
                             tm_e, self.tn_e, self.tk_e, out_dtype)
        if (M_p, self.N_p) != (M, self.out_dim):
            return out_p[:M, :self.out_dim]
        return out_p


if __name__ == "__main__":
    # TODO(synk): only the forward (inference) path is implemented; the
    # module's autograd bookkeeping / backward has no Pallas equivalent here.
    key = jax.random.PRNGKey(0)

    # --- Test 1: module-like small shapes (batch=8, in_dim=32, out_dim=16) ---
    batch, in_dim, out_dim = 8, 32, 16
    k1, k2, k3, key = jax.random.split(key, 4)
    x = jax.random.normal(k1, (batch, in_dim), dtype=jnp.float32)
    bound = 1.0 / (in_dim ** 0.5)
    weight = jax.random.uniform(
        k2, (out_dim, in_dim), minval=-bound, maxval=bound, dtype=jnp.float32)
    bias = jax.random.uniform(
        k3, (out_dim,), minval=-bound, maxval=bound, dtype=jnp.float32)

    y_ref = x @ weight.T + bias
    y = jax.block_until_ready(linear_forward(x, weight, bias))
    assert y.shape == (batch, out_dim)
    assert jnp.allclose(y, y_ref, atol=1e-4, rtol=1e-4)

    # no-bias path
    y_nb = jax.block_until_ready(linear_forward(x, weight, None))
    assert jnp.allclose(y_nb, x @ weight.T, atol=1e-4, rtol=1e-4)

    # cached-weight module-style wrapper
    lin = PallasLinear(weight, bias)
    y_mod = jax.block_until_ready(lin(x))
    assert jnp.allclose(y_mod, y_ref, atol=1e-4, rtol=1e-4)

    # --- Test 2: multi-tile grid (M, N, K tiling + K-accumulation, f32 out) --
    M2, K2_, N2 = 64, 384, 256
    k4, k5, k6, key = jax.random.split(key, 4)
    x2 = jax.random.normal(k4, (M2, K2_), dtype=jnp.float32)
    bound2 = 1.0 / (K2_ ** 0.5)
    w2 = jax.random.uniform(
        k5, (N2, K2_), minval=-bound2, maxval=bound2, dtype=jnp.float32)
    b2 = jax.random.uniform(
        k6, (N2,), minval=-bound2, maxval=bound2, dtype=jnp.float32)

    # explicit small tiles -> grid = (2, 2, 3)
    y2 = jax.block_until_ready(linear_forward(x2, w2, b2, tm=32, tn=128, tk=128))
    y2_ref = x2 @ w2.T + b2
    assert y2.shape == (M2, N2)
    assert jnp.allclose(y2, y2_ref, atol=1e-4, rtol=1e-4)

    # default (large-tile / GEMV fast-path) configuration on the same problem
    y2d = jax.block_until_ready(linear_forward(x2, w2, b2))
    assert jnp.allclose(y2d, y2_ref, atol=1e-4, rtol=1e-4)

    # --- Test 3: bf16 inputs/outputs (exercises the f32-scratch kernel and
    #             dtype-aware sublane rounding: 16-row min tiles for bf16) ----
    M3, K3, N3 = 8, 256, 128
    k7, k8, k9, key = jax.random.split(key, 4)
    x3 = jax.random.normal(k7, (M3, K3), dtype=jnp.float32).astype(jnp.bfloat16)
    bound3 = 1.0 / (K3 ** 0.5)
    w3 = jax.random.uniform(
        k8, (N3, K3), minval=-bound3, maxval=bound3,
        dtype=jnp.float32).astype(jnp.bfloat16)
    b3 = jax.random.uniform(
        k9, (N3,), minval=-bound3, maxval=bound3, dtype=jnp.float32)

    y3 = jax.block_until_ready(linear_forward(x3, w3, b3))
    y3_ref = x3.astype(jnp.float32) @ w3.astype(jnp.float32).T + b3
    assert y3.dtype == jnp.bfloat16 and y3.shape == (M3, N3)
    assert jnp.allclose(y3.astype(jnp.float32), y3_ref, atol=2e-2, rtol=2e-2)

    print("KERNEL_OK")
</pallas_src>

<mosaic_0001>
module attributes {stable_mosaic.version = 11 : i64} {
  func.func @_linear_kernel_f32out(%arg0: i32, %arg1: i32, %arg2: i32, %arg3: memref<8x128xf32, #tpu.memory_space<vmem>>, %arg4: memref<128x128xf32, #tpu.memory_space<vmem>>, %arg5: memref<1x128xf32, #tpu.memory_space<vmem>>, %arg6: memref<8x128xf32, #tpu.memory_space<vmem>>) attributes {dimension_semantics = [#tpu.dimension_semantics<parallel>, #tpu.dimension_semantics<parallel>, #tpu.dimension_semantics<arbitrary>], iteration_bounds = array<i64: 1, 1, 1>, scalar_prefetch = 0 : i64, scratch_operands = 0 : i64, tpu.core_type = #tpu.core_type<tc>, window_params = [{transform_indices = @transform_0, window_bounds = array<i64: 8, 128>}, {transform_indices = @transform_1, window_bounds = array<i64: 128, 128>}, {transform_indices = @transform_2, window_bounds = array<i64: 1, 128>}, {transform_indices = @transform_3, window_bounds = array<i64: 8, 128>}]} {
    %c0_i32 = arith.constant 0 : i32
    %0 = arith.cmpi eq, %arg2, %c0_i32 : i32
    %1 = arith.extui %0 : i1 to i32
    %c0_i32_0 = arith.constant 0 : i32
    %2 = arith.cmpi ne, %1, %c0_i32_0 : i32
    scf.if %2 {
      %cst_10 = arith.constant 0.000000e+00 : f32
      %12 = vector.broadcast %cst_10 : f32 to vector<8x128xf32>
      %c0_11 = arith.constant 0 : index
      %c0_12 = arith.constant 0 : index
      %13 = vector.load %arg6[%c0_11, %c0_12] : memref<8x128xf32, #tpu.memory_space<vmem>>, vector<8x128xf32>
      tpu.vector_store %arg6[%c0_11, %c0_12], %12 {strides = array<i32>} : memref<8x128xf32, #tpu.memory_space<vmem>>, vector<8x128xf32>,
    } else {
    }
    %c0 = arith.constant 0 : index
    %c0_1 = arith.constant 0 : index
    %3 = vector.load %arg6[%c0, %c0_1] : memref<8x128xf32, #tpu.memory_space<vmem>>, vector<8x128xf32>
    %c0_2 = arith.constant 0 : index
    %c0_3 = arith.constant 0 : index
    %4 = vector.load %arg3[%c0_2, %c0_3] : memref<8x128xf32, #tpu.memory_space<vmem>>, vector<8x128xf32>
    %c0_4 = arith.constant 0 : index
    %c0_5 = arith.constant 0 : index
    %5 = vector.load %arg4[%c0_4, %c0_5] : memref<128x128xf32, #tpu.memory_space<vmem>>, vector<128x128xf32>
    %cst = arith.constant dense<0.000000e+00> : vector<8x128xf32>
    %6 = tpu.matmul %4, %5, %cst {dimension_numbers = #tpu.dot_dimension_numbers<[1], [0], [0], [1], [0, 0, 1, 1], [], []>} : vector<8x128xf32>, vector<128x128xf32>, vector<8x128xf32> -> vector<8x128xf32>
    %7 = arith.addf %3, %6 : vector<8x128xf32>
    %c0_6 = arith.constant 0 : index
    %c0_7 = arith.constant 0 : index
    %8 = vector.load %arg6[%c0_6, %c0_7] : memref<8x128xf32, #tpu.memory_space<vmem>>, vector<8x128xf32>
    tpu.vector_store %arg6[%c0_6, %c0_7], %7 {strides = array<i32>} : memref<8x128xf32, #tpu.memory_space<vmem>>, vector<8x128xf32>,
    %c0_i32_8 = arith.constant 0 : i32
    %9 = arith.cmpi eq, %arg2, %c0_i32_8 : i32
    %10 = arith.extui %9 : i1 to i32
    %c0_i32_9 = arith.constant 0 : i32
    %11 = arith.cmpi ne, %10, %c0_i32_9 : i32
    scf.if %11 {
      %c0_10 = arith.constant 0 : index
      %c0_11 = arith.constant 0 : index
      %12 = vector.load %arg6[%c0_10, %c0_11] : memref<8x128xf32, #tpu.memory_space<vmem>>, vector<8x128xf32>
      %c0_12 = arith.constant 0 : index
      %c0_13 = arith.constant 0 : index
      %13 = vector.load %arg5[%c0_12, %c0_13] : memref<1x128xf32, #tpu.memory_space<vmem>>, vector<1x128xf32>
      %14 = vector.broadcast %13 : vector<1x128xf32> to vector<8x128xf32>
      %15 = arith.addf %12, %14 : vector<8x128xf32>
      %c0_14 = arith.constant 0 : index
      %c0_15 = arith.constant 0 : index
      %16 = vector.load %arg6[%c0_14, %c0_15] : memref<8x128xf32, #tpu.memory_space<vmem>>, vector<8x128xf32>
      tpu.vector_store %arg6[%c0_14, %c0_15], %15 {strides = array<i32>} : memref<8x128xf32, #tpu.memory_space<vmem>>, vector<8x128xf32>,
    } else {
    }
    return
  }
  func.func @transform_0(%arg0: i32, %arg1: i32, %arg2: i32) -> (i32, i32) {
    %c0_i32 = arith.constant 0 : i32
    return %arg0, %arg2 : i32, i32
  }
  func.func @transform_1(%arg0: i32, %arg1: i32, %arg2: i32) -> (i32, i32) {
    %c0_i32 = arith.constant 0 : i32
    return %arg2, %arg1 : i32, i32
  }
  func.func @transform_2(%arg0: i32, %arg1: i32, %arg2: i32) -> (i32, i32) {
    %c0_i32 = arith.constant 0 : i32
    %c0_i32_0 = arith.constant 0 : i32
    return %c0_i32, %arg1 : i32, i32
  }
  func.func @transform_3(%arg0: i32, %arg1: i32, %arg2: i32) -> (i32, i32) {
    %c0_i32 = arith.constant 0 : i32
    return %arg0, %arg1 : i32, i32
  }
}

</mosaic_0001>

<llo_original>
// kernel: tpu_custom_call.1
$region0: #{tpu_custom_call.1}
  #allocation0 [shape = 'u32[]', space=smem, size = 0x4, offset = 0x4, fixed_abs, tag = 'smem constant byte address 0x4 - core index']
  #allocation1 [shape = 'u32[144,128]{1,0:T(1,128)}', space=vmem, size = 0x12000, scoped, tag = 'internal scratch']
  %s0 = inlined_call_operand.hbm [shape: f32[8,128], index: 0, kind: input, shape index: {}]
  %s1 = inlined_call_operand.hbm [shape: f32[128,128], index: 1, kind: input, shape index: {}]
  %s2 = inlined_call_operand.vmem [shape: f32[1,128], index: 2, kind: input, shape index: {}]
  %s3 = inlined_call_operand.hbm [shape: f32[8,128], index: 3, kind: output, shape index: {}]
  %s4 = sld [smem:[#allocation0]]
  $region38: #{tpu_custom_call.1} parent=0
    _
  %s6 = ssub.s32 1, %s4
  %s7 = scalar_select 0, %s6, %s4
  $region1: #{tpu_custom_call.1} parent=0
    #allocation2 [shape = 'u8[4096]{0}', space=vmem, size = 0x1000, scoped, tag = 'input window, operand 0, single buffered']
    #allocation3 [shape = 's32[1]{0}', space=sflag, size = 0x4, scoped, tag = 'scoped memory for tpu_custom_call.1']
    #allocation4 [shape = 's32[1]{0}', space=sflag, size = 0x4, scoped, tag = 'scoped memory for tpu_custom_call.1']
    #allocation5 [shape = 'u8[65536]{0}', space=vmem, size = 0x10000, scoped, tag = 'input window, operand 1, single buffered']
    #allocation6 [shape = 's32[1]{0}', space=sflag, size = 0x4, scoped, tag = 'scoped memory for tpu_custom_call.1']
    #allocation7 [shape = 'u8[4096]{0}', space=vmem, size = 0x1000, scoped, tag = 'output window, operand 0, single buffered']
    %8 = vsyncpa [#allocation3], 0
    %9 = vsyncpa [#allocation6], 0
    %10 = vsyncpa [#allocation4], 0
    // Predicated region
    $region2: #{tpu_custom_call.1} parent=1 // pred_check
      _
    $region3: #{tpu_custom_call.1} parent=1 // pred_check_branch
      %12 = sbr.rel (0) target = $region5
    $region4: #{tpu_custom_call.1} parent=1 // pred_region
      %s14 = ssub.s32 128, 128
      %15 = vsyncadd [#allocation3], %s14
      %s17 = sshll.u32 [#allocation2], 4
      %s18 = int_to_ptr.vmem [resolvable:$true] %s17
      %20 = dma.hbm_to_vmem [thread:$0]  %s0, 128, %s18, [#allocation3]
    $region5: #{tpu_custom_call.1} parent=1 // pred_fallthru
      _
    // Predicated region
    $region6: #{tpu_custom_call.1} parent=1 // pred_check
      _
    $region7: #{tpu_custom_call.1} parent=1 // pred_check_branch
      %22 = sbr.rel (0) target = $region9
    $region8: #{tpu_custom_call.1} parent=1 // pred_region
      %s24 = ssub.s32 2048, 2048
      %25 = vsyncadd [#allocation6], %s24
      %s26 = sshll.u32 [#allocation5], 4
      %s27 = int_to_ptr.vmem [resolvable:$true] %s26
      %32 = dma.hbm_to_vmem [thread:$0]  %s1, 2048, %s27, [#allocation6], 128, 128, 8
    $region9: #{tpu_custom_call.1} parent=1 // pred_fallthru
      _
    // Predicated region
    $region10: #{tpu_custom_call.1} parent=1 // pred_check
      _
    $region11: #{tpu_custom_call.1} parent=1 // pred_check_branch
      %34 = sbr.rel (0) target = $region13
    $region12: #{tpu_custom_call.1} parent=1 // pred_region
      _
    $region13: #{tpu_custom_call.1} parent=1 // pred_fallthru
      _
    // Predicated region
    $region14: #{tpu_custom_call.1} parent=1 // pred_check
      _
    $region15: #{tpu_custom_call.1} parent=1 // pred_check_branch
      %36 = sbr.rel (0) target = $region17
    $region16: #{tpu_custom_call.1} parent=1 // pred_region
      %37 = dma.done [#allocation3], 128
    $region17: #{tpu_custom_call.1} parent=1 // pred_fallthru
      _
    // Predicated region
    $region18: #{tpu_custom_call.1} parent=1 // pred_check
      _
    $region19: #{tpu_custom_call.1} parent=1 // pred_check_branch
      %39 = sbr.rel (0) target = $region21
    $region20: #{tpu_custom_call.1} parent=1 // pred_region
      %40 = dma.done [#allocation6], 2048
    $region21: #{tpu_custom_call.1} parent=1 // pred_fallthru
      _
    %p41 = scmp.eq.s32.totalorder 0, 0
    // Predicated region
    $region22: #{tpu_custom_call.1} parent=1 // pred_check
      %p42 = pneg %p41
    $region23: #{tpu_custom_call.1} parent=1 // pred_check_branch
      %44 = sbr.rel (%p42) target = $region25
    $region24: #{tpu_custom_call.1} parent=1 // pred_region
      %45 = vst [vmem:[#allocation7] sm:$0xff] 0.0
    $region25: #{tpu_custom_call.1} parent=1 // pred_fallthru
      _
    %v46 = vld [vmem:[#allocation7] sm:$0xff]
    %v47 = vld [vmem:[#allocation2] sm:$0xff]
    %v48 = vld [vmem:[#allocation5] sm:$0xff]
    %v49 = vld [vmem:[#allocation5 + $0x8] sm:$0xff]
    %v50 = vld [vmem:[#allocation5 + $0x10] sm:$0xff]
    %v51 = vld [vmem:[#allocation5 + $0x18] sm:$0xff]
    %v52 = vld [vmem:[#allocation5 + $0x20] sm:$0xff]
    %v53 = vld [vmem:[#allocation5 + $0x28] sm:$0xff]
    %v54 = vld [vmem:[#allocation5 + $0x30] sm:$0xff]
    %v55 = vld [vmem:[#allocation5 + $0x38] sm:$0xff]
    %v56 = vld [vmem:[#allocation5 + $0x40] sm:$0xff]
    %v57 = vld [vmem:[#allocation5 + $0x48] sm:$0xff]
    %v58 = vld [vmem:[#allocation5 + $0x50] sm:$0xff]
    %v59 = vld [vmem:[#allocation5 + $0x58] sm:$0xff]
    %v60 = vld [vmem:[#allocation5 + $0x60] sm:$0xff]
    %v61 = vld [vmem:[#allocation5 + $0x68] sm:$0xff]
    %v62 = vld [vmem:[#allocation5 + $0x70] sm:$0xff]
    %v63 = vld [vmem:[#allocation5 + $0x78] sm:$0xff]
    %64 = vmatprep.subr.mxu0 0.0
    %65 = vmatpush1.msra.mxu0 %v48
    %66 = vmatprep.subr.mxu0 0.0
    %67 = vmatpush1.msra.mxu0 %v49
    %68 = vmatprep.subr.mxu0 0.0
    %69 = vmatpush1.msra.mxu0 %v50
    %70 = vmatprep.subr.mxu0 0.0
    %71 = vmatpush1.msra.mxu0 %v51
    %72 = vmatprep.subr.mxu0 0.0
    %73 = vmatpush1.msra.mxu0 %v52
    %74 = vmatprep.subr.mxu0 0.0
    %75 = vmatpush1.msra.mxu0 %v53
    %76 = vmatprep.subr.mxu0 0.0
    %77 = vmatpush1.msra.mxu0 %v54
    %78 = vmatprep.subr.mxu0 0.0
    %79 = vmatpush1.msra.mxu0 %v55
    %80 = vmatprep.subr.mxu0 0.0
    %81 = vmatpush1.msra.mxu0 %v56
    %82 = vmatprep.subr.mxu0 0.0
    %83 = vmatpush1.msra.mxu0 %v57
    %84 = vmatprep.subr.mxu0 0.0
    %85 = vmatpush1.msra.mxu0 %v58
    %86 = vmatprep.subr.mxu0 0.0
    %87 = vmatpush1.msra.mxu0 %v59
    %88 = vmatprep.subr.mxu0 0.0
    %89 = vmatpush1.msra.mxu0 %v60
    %90 = vmatprep.subr.mxu0 0.0
    %91 = vmatpush1.msra.mxu0 %v61
    %92 = vmatprep.subr.mxu0 0.0
    %93 = vmatpush1.msra.mxu0 %v62
    %94 = vmatprep.subr.mxu0 0.0
    %95 = vmatpush1.msra.mxu0 %v63
    %96 = vmatprep.subr.mxu0 0.0
    %97 = vmatpush1.msra.mxu0 0.0
    %98 = vmatprep.subr.mxu0 0.0
    %99 = vmatpush1.msra.mxu0 0.0
    %100 = vmatprep.subr.mxu0 0.0
    %101 = vmatpush1.msra.mxu0 0.0
    %102 = vmatprep.subr.mxu0 0.0
    %103 = vmatpush1.msra.mxu0 0.0
    %104 = vmatprep.subr.mxu0 0.0
    %105 = vmatpush1.msra.mxu0 0.0
    %106 = vmatprep.subr.mxu0 0.0
    %107 = vmatpush1.msra.mxu0 0.0
    %108 = vmatprep.subr.mxu0 0.0
    %109 = vmatpush1.msra.mxu0 0.0
    %110 = vmatprep.subr.mxu0 0.0
    %111 = vmatpush1.msra.mxu0 0.0
    %112 = vmatprep.subr.mxu0 0.0
    %113 = vmatpush1.msra.mxu0 0.0
    %114 = vmatprep.subr.mxu0 0.0
    %115 = vmatpush1.msra.mxu0 0.0
    %116 = vmatprep.subr.mxu0 0.0
    %117 = vmatpush1.msra.mxu0 0.0
    %118 = vmatprep.subr.mxu0 0.0
    %119 = vmatpush1.msra.mxu0 0.0
    %120 = vmatprep.subr.mxu0 0.0
    %121 = vmatpush1.msra.mxu0 0.0
    %122 = vmatprep.subr.mxu0 0.0
    %123 = vmatpush1.msra.mxu0 0.0
    %124 = vmatprep.subr.mxu0 0.0
    %125 = vmatpush1.msra.mxu0 0.0
    %126 = vmatprep.subr.mxu0 0.0
    %127 = vmatpush1.msra.mxu0 0.0
    %128 = vmatprep.mubr.f32.mxu0 0.0
    %129 = vmatmul.mubr.f32.gmra.mrb[0].mxu0 %v47
    %v130 = vpop.f32.mrb[0].mxu0
    %v131 = vadd.f32 0.0, %v130
    %v132 = vpop.f32.mrb[0].mxu0
    %133 = vdwg.mxu0
    %v134 = vadd.f32 %v46, %v131
    %135 = vst [vmem:[#allocation7] sm:$0xff] %v134
    // Predicated region
    $region26: #{tpu_custom_call.1} parent=1 // pred_check
      %p136 = pneg %p41
    $region27: #{tpu_custom_call.1} parent=1 // pred_check_branch
      %138 = sbr.rel (%p136) target = $region29
    $region28: #{tpu_custom_call.1} parent=1 // pred_region
      %v139 = vld [vmem:[#allocation7] sm:$0xff]
      %v140 = vld [vmem:[%s2] sm:$0x1]
      %v142 = vlaneseq
      %v143 = vshrl.u32 %v142, 7
      %v144 = vsub.s32 0, %v143
      %v145 = vrot.slane %v140, %v144
      %v147 = vadd.f32 %v139, %v145
      %148 = vst [vmem:[#allocation7] sm:$0xff] %v147
    $region29: #{tpu_custom_call.1} parent=1 // pred_fallthru
      _
    // Predicated region
    $region30: #{tpu_custom_call.1} parent=1 // pred_check
      _
    $region31: #{tpu_custom_call.1} parent=1 // pred_check_branch
      %150 = sbr.rel (0) target = $region33
    $region32: #{tpu_custom_call.1} parent=1 // pred_region
      %s152 = ssub.s32 128, 128
      %153 = vsyncadd [#allocation4], %s152
      %s155 = sshll.u32 [#allocation7], 4
      %s156 = int_to_ptr.vmem [resolvable:$true] %s155
      %158 = dma.vmem_to_hbm [thread:$0]  %s156, 128, %s3, [#allocation4]
    $region33: #{tpu_custom_call.1} parent=1 // pred_fallthru
      _
    // Predicated region
    $region34: #{tpu_custom_call.1} parent=1 // pred_check
      _
    $region35: #{tpu_custom_call.1} parent=1 // pred_check_branch
      %160 = sbr.rel (0) target = $region37
    $region36: #{tpu_custom_call.1} parent=1 // pred_region
      %161 = dma.done [#allocation4], 128
    $region37: #{tpu_custom_call.1} parent=1 // pred_fallthru
      _
    %162 = vsyncpa [#allocation3], 1
    %163 = vsyncpa [#allocation6], 1
    %164 = vsyncpa [#allocation4], 1

</llo_original>
